<compile_context>
chip_gen: v5e
topology: v5e:2x2
jax: 0.10.0
libtpu: 0.0.40
codegen_flags: <defaults>
</compile_context>

<pallas_src>
import jax
import jax.numpy as jnp
from jax.experimental import pallas as pl
from jax.experimental.pallas import tpu as pltpu

_K = 3       # Conv1d kernel_size=3, padding=1 (same-length conv)
_LANE = 128  # TPU lane width


def _conv_relu_maxpool_kernel(xp_ref, w_ref, b_ref, o_ref):
    """One batch-block of Conv1d(k=3,pad=1) -> ReLU -> AdaptiveMaxPool1d(1).

    xp_ref: (NB, L+2, C_in)     f32  zero length-padded activations
    w_ref : (K*C_in, C_out_pad) f32  fused tap-major conv weights (lane padded)
    b_ref : (1, C_out_pad)      f32  bias (lane padded)
    o_ref : (NB, C_out_pad)     f32  pooled features for this batch block
    """
    nb, lp2, cin = xp_ref.shape
    l = lp2 - 2
    xp = xp_ref[...]
    # In-VMEM im2col (no HBM blow-up): tap-major concat of 3 shifted windows.
    cols = jnp.concatenate([xp[:, k:k + l, :] for k in range(_K)], axis=-1)
    cols = cols.reshape(nb * l, _K * cin)                      # (NB*L, 3*C_in)
    # Single MXU push: (NB*L, 3*C_in) @ (3*C_in, C_out_pad), f32 accumulation.
    y = jnp.dot(cols, w_ref[...], preferred_element_type=jnp.float32)
    # AdaptiveMaxPool1d(1) over length. Bias + ReLU hoisted past the max
    # (exact: bias is constant over L, ReLU is monotone).
    # NOTE: keep L a multiple of 8 for a free (tile-aligned) reshape; at other
    # L the reshape just costs a small VMEM copy (still correct).
    m = jnp.max(y.reshape(nb, l, y.shape[-1]), axis=1)         # (NB, C_out_pad)
    o_ref[...] = jnp.maximum(m + b_ref[...], 0.0)


def _pick_batch_block(n, l):
    # Target >= 256 matmul rows per grid step (fills a v6e/v7x MXU push and
    # automatically satisfies the 128-row v5e granule), but keep at least two
    # grid steps when N allows so the "parallel" batch axis has work for both
    # TensorCores on v7x.
    target = max(1, pl.cdiv(256, l))
    if n >= 2:
        target = min(target, max(1, n // 2))
    return max(1, target)


def deep_feature_extractor(x_ncl, weight, bias, *, nb=None):
    """x_ncl : (N, C_in, L) f32, PyTorch NCL layout.
       weight: (C_out, C_in, 3) f32 (PyTorch Conv1d layout).
       bias  : (C_out,) f32.
       returns (N, C_out) f32 == conv1d(k=3,pad=1) -> relu -> max over L."""
    N, C_in, L = x_ncl.shape
    C_out, _, K = weight.shape
    assert K == _K

    C_out_pad = max(_LANE, pl.cdiv(C_out, _LANE) * _LANE)      # lane-dense out
    NB = nb if nb is not None else _pick_batch_block(N, L)
    N_pad = pl.cdiv(N, NB) * NB
    G = N_pad // NB

    # Layout glue (done once / constant-folded under jit): NCL -> NLC,
    # zero-pad L for padding=1, zero-pad batch up to a multiple of NB.
    x_nlc = jnp.transpose(x_ncl, (0, 2, 1))                     # (N, L, C_in)
    x_pad = jnp.pad(x_nlc, ((0, N_pad - N), (1, 1), (0, 0)))    # (N_pad, L+2, C_in)

    # Fused tap-major weight (K, C_in, C_out) -> (K*C_in, C_out_pad); pad the
    # output channels to a 128-lane multiple so stores are unmasked.
    w_kc = jnp.transpose(weight, (2, 1, 0)).reshape(K * C_in, C_out)
    w_kc = jnp.pad(w_kc, ((0, 0), (0, C_out_pad - C_out))).astype(jnp.float32)
    b_2d = jnp.pad(bias.reshape(1, C_out),
                   ((0, 0), (0, C_out_pad - C_out))).astype(jnp.float32)

    # TODO(synk): for very long L, add an "arbitrary" grid axis over L-chunks
    # with a running-max VMEM scratch (pl.when init/finalize) instead of
    # keeping the full (NB*L, C_out_pad) matmul result live in one block.
    out = pl.pallas_call(
        _conv_relu_maxpool_kernel,
        out_shape=jax.ShapeDtypeStruct((G, NB, C_out_pad), jnp.float32),
        grid_spec=pltpu.PrefetchScalarGridSpec(
            num_scalar_prefetch=0,
            grid=(G,),
            in_specs=[
                pl.BlockSpec((NB, L + 2, C_in), lambda n: (n, 0, 0)),
                pl.BlockSpec((K * C_in, C_out_pad), lambda n: (0, 0)),
                pl.BlockSpec((1, C_out_pad), lambda n: (0, 0)),
            ],
            out_specs=pl.BlockSpec((None, NB, C_out_pad), lambda n: (n, 0, 0)),
        ),
        compiler_params=pltpu.CompilerParams(
            dimension_semantics=("parallel",)),
    )(x_pad, w_kc, b_2d)

    return out.reshape(N_pad, C_out_pad)[:N, :C_out]            # (N, C_out)


def _reference(x_ncl, weight, bias):
    # Plain-JAX f32 reference of the same forward pass (correctness check).
    L = x_ncl.shape[2]
    x_nlc = jnp.transpose(x_ncl, (0, 2, 1)).astype(jnp.float32)
    x_pad = jnp.pad(x_nlc, ((0, 0), (1, 1), (0, 0)))
    w_kic = jnp.transpose(weight, (2, 1, 0)).astype(jnp.float32)  # (K, C_in, C_out)
    y = 0.0
    for k in range(weight.shape[2]):
        y = y + jnp.einsum("nlc,cf->nlf", x_pad[:, k:k + L, :], w_kic[k])
    y = jnp.maximum(y + bias[None, None, :], 0.0)
    return jnp.max(y, axis=1)


if __name__ == "__main__":
    # Small shapes consistent with the module: batch=2, input_channels=4,
    # sequence length=16, feature_dim=32.
    N, C_in, L, C_out = 2, 4, 16, 32

    key = jax.random.PRNGKey(0)
    kx, kw, kb = jax.random.split(key, 3)
    x = jax.random.normal(kx, (N, C_in, L), dtype=jnp.float32)
    # Deterministic synthetic parameters (PyTorch Conv1d shapes).
    weight = 0.1 * jax.random.normal(kw, (C_out, C_in, 3), dtype=jnp.float32)
    bias = 0.05 * jax.random.normal(kb, (C_out,), dtype=jnp.float32)

    fwd = jax.jit(deep_feature_extractor)
    out = jax.block_until_ready(fwd(x, weight, bias))
    ref = jax.block_until_ready(_reference(x, weight, bias))

    assert out.shape == (N, C_out)
    # f32 MXU operands; small slack for MXU multi-pass f32 accumulation.
    assert jnp.allclose(out, ref, atol=5e-3, rtol=5e-3)

    print("KERNEL_OK")
</pallas_src>

<mosaic_0001>
module attributes {stable_mosaic.version = 11 : i64} {
  func.func @_conv_relu_maxpool_kernel(%arg0: i32, %arg1: memref<1x18x4xf32, #tpu.memory_space<vmem>>, %arg2: memref<12x128xf32, #tpu.memory_space<vmem>>, %arg3: memref<1x128xf32, #tpu.memory_space<vmem>>, %arg4: memref<1x1x128xf32, #tpu.memory_space<vmem>>) attributes {dimension_semantics = [#tpu.dimension_semantics<parallel>], iteration_bounds = array<i64: 2>, scalar_prefetch = 0 : i64, scratch_operands = 0 : i64, tpu.core_type = #tpu.core_type<tc>, window_params = [{transform_indices = @transform_0, window_bounds = array<i64: 1, 18, 4>}, {pipeline_mode = #tpu.pipeline_mode<synchronous>, transform_indices = @transform_1, window_bounds = array<i64: 12, 128>}, {pipeline_mode = #tpu.pipeline_mode<synchronous>, transform_indices = @transform_2, window_bounds = array<i64: 1, 128>}, {transform_indices = @transform_3, window_bounds = array<i64: 1, 1, 128>}]} {
    %c0 = arith.constant 0 : index
    %c0_0 = arith.constant 0 : index
    %c0_1 = arith.constant 0 : index
    %0 = vector.load %arg1[%c0, %c0_0, %c0_1] : memref<1x18x4xf32, #tpu.memory_space<vmem>>, vector<1x18x4xf32>
    %1 = vector.extract_strided_slice %0 {offsets = [0, 0, 0], sizes = [1, 16, 4], strides = [1, 1, 1]} : vector<1x18x4xf32> to vector<1x16x4xf32>
    %2 = vector.extract_strided_slice %0 {offsets = [0, 1, 0], sizes = [1, 16, 4], strides = [1, 1, 1]} : vector<1x18x4xf32> to vector<1x16x4xf32>
    %3 = vector.extract_strided_slice %0 {offsets = [0, 2, 0], sizes = [1, 16, 4], strides = [1, 1, 1]} : vector<1x18x4xf32> to vector<1x16x4xf32>
    %4 = tpu.concatenate %1, %2, %3 in 2 : vector<1x16x4xf32>, vector<1x16x4xf32>, vector<1x16x4xf32> -> vector<1x16x12xf32>
    %5 = vector.shape_cast %4 : vector<1x16x12xf32> to vector<16x12xf32>
    %c0_2 = arith.constant 0 : index
    %c0_3 = arith.constant 0 : index
    %6 = vector.load %arg2[%c0_2, %c0_3] : memref<12x128xf32, #tpu.memory_space<vmem>>, vector<12x128xf32>
    %cst = arith.constant dense<0.000000e+00> : vector<16x128xf32>
    %7 = tpu.matmul %5, %6, %cst {dimension_numbers = #tpu.dot_dimension_numbers<[1], [0], [0], [1], [0, 0, 1, 1], [], []>} : vector<16x12xf32>, vector<12x128xf32>, vector<16x128xf32> -> vector<16x128xf32>
    %8 = vector.shape_cast %7 : vector<16x128xf32> to vector<1x16x128xf32>
    %cst_4 = arith.constant dense<0xFF800000> : vector<1x128xf32>
    %9 = vector.multi_reduction <maximumf>, %8, %cst_4 [1] : vector<1x16x128xf32> to vector<1x128xf32>
    %c0_5 = arith.constant 0 : index
    %c0_6 = arith.constant 0 : index
    %10 = vector.load %arg3[%c0_5, %c0_6] : memref<1x128xf32, #tpu.memory_space<vmem>>, vector<1x128xf32>
    %11 = arith.addf %9, %10 : vector<1x128xf32>
    %cst_7 = arith.constant 0.000000e+00 : f32
    %12 = vector.broadcast %cst_7 : f32 to vector<1x128xf32>
    %13 = arith.maximumf %11, %12 : vector<1x128xf32>
    %c0_8 = arith.constant 0 : index
    %c0_9 = arith.constant 0 : index
    %c0_10 = arith.constant 0 : index
    %14 = vector.load %arg4[%c0_8, %c0_9, %c0_10] : memref<1x1x128xf32, #tpu.memory_space<vmem>>, vector<1x1x128xf32>
    %15 = vector.shape_cast %14 : vector<1x1x128xf32> to vector<1x128xf32>
    %16 = vector.shape_cast %13 : vector<1x128xf32> to vector<1x1x128xf32>
    tpu.vector_store %arg4[%c0_8, %c0_9, %c0_10], %16 {strides = array<i32>} : memref<1x1x128xf32, #tpu.memory_space<vmem>>, vector<1x1x128xf32>,
    return
  }
  func.func @transform_0(%arg0: i32) -> (i32, i32, i32) {
    %c0_i32 = arith.constant 0 : i32
    %c0_i32_0 = arith.constant 0 : i32
    %c0_i32_1 = arith.constant 0 : i32
    return %arg0, %c0_i32, %c0_i32_0 : i32, i32, i32
  }
  func.func @transform_1(%arg0: i32) -> (i32, i32) {
    %c0_i32 = arith.constant 0 : i32
    %c0_i32_0 = arith.constant 0 : i32
    %c0_i32_1 = arith.constant 0 : i32
    return %c0_i32, %c0_i32_0 : i32, i32
  }
  func.func @transform_2(%arg0: i32) -> (i32, i32) {
    %c0_i32 = arith.constant 0 : i32
    %c0_i32_0 = arith.constant 0 : i32
    %c0_i32_1 = arith.constant 0 : i32
    return %c0_i32, %c0_i32_0 : i32, i32
  }
  func.func @transform_3(%arg0: i32) -> (i32, i32, i32) {
    %c0_i32 = arith.constant 0 : i32
    %c0_i32_0 = arith.constant 0 : i32
    %c0_i32_1 = arith.constant 0 : i32
    return %arg0, %c0_i32, %c0_i32_0 : i32, i32, i32
  }
}

</mosaic_0001>

<llo_original>
// kernel: deep_feature_extractor.1
$region0: #{deep_feature_extractor.1}
  #allocation0 [shape = 'u32[]', space=smem, size = 0x4, offset = 0x4, fixed_abs, tag = 'smem constant byte address 0x4 - core index']
  #allocation1 [shape = 'u32[72,128]{1,0:T(1,128)}', space=vmem, size = 0x9000, scoped, tag = 'internal scratch']
  %s0 = inlined_call_operand.vmem [shape: f32[2,18,4], index: 0, kind: input, shape index: {}]
  %s1 = inlined_call_operand.vmem [shape: f32[12,128], index: 1, kind: input, shape index: {}]
  %s2 = inlined_call_operand.vmem [shape: f32[1,128], index: 2, kind: input, shape index: {}]
  %s3 = inlined_call_operand.hbm [shape: f32[2,1,128], index: 3, kind: output, shape index: {}]
  %s4 = sld [smem:[#allocation0]]
  $region45: #{deep_feature_extractor.1} parent=0
    _
  %s6 = ssub.s32 1, %s4
  %s7 = scalar_select 0, %s6, %s4
  $region1: #{deep_feature_extractor.1} parent=0
    #allocation2 [shape = 'u8[1024]{0}', space=vmem, size = 0x400, scoped, tag = 'output window, operand 0']
    #allocation3 [shape = 's32[2]{0}', space=sflag, size = 0x8, scoped, tag = 'scoped memory for deep_feature_extractor.1']
    %8 = vsyncpa [#allocation3], 0
    %s9 = scalar_lea.sflag [#allocation3], 1
    %10 = vsyncpa %s9, 0
    loop: start=0, step=1, limit=4
    $region2: #{deep_feature_extractor.1} parent=1 // loop_pre_header
      _
    $region3: #{deep_feature_extractor.1} parent=1 // loop_header
      %s12 = sphi 0, %s16
      %p13 = scmp.ge.s32.totalorder %s12, 4
      %s22 = sphi 0, %s24
      %s25 = sphi 0, %s22
      %s26 = sphi 0, %s25
      %s42 = sphi 0, %s26
      %s46 = sphi 0, %s46
      %s48 = sphi 0, %s46
      %s49 = sphi 0, %s48
      %s63 = sphi 0, %s49
      %s67 = sphi 0, %s67
      %s69 = sphi 0, %s67
      %s70 = sphi 0, %s69
      %s84 = sphi 0, %s70
      %s90 = sphi 0, %s92
      %s93 = sphi 0, %s90
      %s94 = sphi 0, %s93
      %s110 = sphi 0, %s94
    $region4: #{deep_feature_extractor.1} parent=1 // loop_header_branch
      %15 = sbr.rel (%p13) target = $region8
    $region5: #{deep_feature_extractor.1} parent=1 // loop_body
      %s17 = ssub.s32 %s12, 1
      %s18 = ssub.s32 %s12, 2
      %s19 = sadd.s32 %s12, 1
      %s20 = ssub.s32 %s12, %s19
      %p21 = scmp.eq.s32.totalorder %s20, 0
      %s23 = sadd.s32 %s22, 1
      %s24 = scalar_select %p21, %s22, %s23
      %p27 = pneg %p21
      %p28 = scmp.eq.s32.totalorder %s12, 1
      %p29 = por %p27, %p28
      %p30 = scmp.ne.s32.totalorder %s22, %s25
      %p31 = scmp.eq.s32.totalorder %s12, 0
      %p32 = por %p30, %p31
      %p33 = scmp.ne.s32.totalorder %s22, %s25
      %p34 = scmp.eq.s32.totalorder %s17, 1
      %p35 = por %p33, %p34
      %p36 = scmp.ne.s32.totalorder %s25, %s26
      %p37 = scmp.eq.s32.totalorder %s17, 0
      %p38 = por %p36, %p37
      %p39 = scmp.ne.s32.totalorder %s25, %s26
      %p40 = scmp.eq.s32.totalorder %s18, 1
      %p41 = por %p39, %p40
      %p43 = scmp.ne.s32.totalorder %s26, %s42
      %p44 = scmp.eq.s32.totalorder %s18, 0
      %p45 = por %p43, %p44
      %s47 = sadd.s32 %s46, 1
      %p50 = scmp.eq.s32.totalorder %s12, 1
      %p51 = scmp.ne.s32.totalorder %s46, %s48
      %p52 = scmp.eq.s32.totalorder %s12, 0
      %p53 = por %p51, %p52
      %p54 = scmp.ne.s32.totalorder %s46, %s48
      %p55 = scmp.eq.s32.totalorder %s17, 1
      %p56 = por %p54, %p55
      %p57 = scmp.ne.s32.totalorder %s48, %s49
      %p58 = scmp.eq.s32.totalorder %s17, 0
      %p59 = por %p57, %p58
      %p60 = scmp.ne.s32.totalorder %s48, %s49
      %p61 = scmp.eq.s32.totalorder %s18, 1
      %p62 = por %p60, %p61
      %p64 = scmp.ne.s32.totalorder %s49, %s63
      %p65 = scmp.eq.s32.totalorder %s18, 0
      %p66 = por %p64, %p65
      %s68 = sadd.s32 %s67, 1
      %p71 = scmp.eq.s32.totalorder %s12, 1
      %p72 = scmp.ne.s32.totalorder %s67, %s69
      %p73 = scmp.eq.s32.totalorder %s12, 0
      %p74 = por %p72, %p73
      %p75 = scmp.ne.s32.totalorder %s67, %s69
      %p76 = scmp.eq.s32.totalorder %s17, 1
      %p77 = por %p75, %p76
      %p78 = scmp.ne.s32.totalorder %s69, %s70
      %p79 = scmp.eq.s32.totalorder %s17, 0
      %p80 = por %p78, %p79
      %p81 = scmp.ne.s32.totalorder %s69, %s70
      %p82 = scmp.eq.s32.totalorder %s18, 1
      %p83 = por %p81, %p82
      %p85 = scmp.ne.s32.totalorder %s70, %s84
      %p86 = scmp.eq.s32.totalorder %s18, 0
      %p87 = por %p85, %p86
      %s88 = ssub.s32 %s12, %s19
      %p89 = scmp.eq.s32.totalorder %s88, 0
      %s91 = sadd.s32 %s90, 1
      %s92 = scalar_select %p89, %s90, %s91
      %p95 = pneg %p89
      %p96 = scmp.eq.s32.totalorder %s12, 1
      %p97 = por %p95, %p96
      %p98 = scmp.ne.s32.totalorder %s90, %s93
      %p99 = scmp.eq.s32.totalorder %s12, 0
      %p100 = por %p98, %p99
      %p101 = scmp.ne.s32.totalorder %s90, %s93
      %p102 = scmp.eq.s32.totalorder %s17, 1
      %p103 = por %p101, %p102
      %p104 = scmp.ne.s32.totalorder %s93, %s94
      %p105 = scmp.eq.s32.totalorder %s17, 0
      %p106 = por %p104, %p105
      %p107 = scmp.ne.s32.totalorder %s93, %s94
      %p108 = scmp.eq.s32.totalorder %s18, 1
      %p109 = por %p107, %p108
      %p111 = scmp.ne.s32.totalorder %s94, %s110
      %p112 = scmp.eq.s32.totalorder %s18, 0
      %p113 = por %p111, %p112
      %p114 = scmp.le.s32.totalorder 1, %s12
      %p115 = scmp.lt.s32.totalorder %s12, 3
      %p116 = pnand %p114, %p115
      %p117 = pneg %p116
      // Predicated region
      $region9: #{deep_feature_extractor.1} parent=5 // pred_check
        _
      $region10: #{deep_feature_extractor.1} parent=5 // pred_check_branch
        %119 = sbr.rel (%p116) target = $region12
      $region11: #{deep_feature_extractor.1} parent=5 // pred_region
        %s120 = ssub.s32 %s12, 1
        // Predicated region
        $region13: #{deep_feature_extractor.1} parent=11 // pred_check
          %p121 = pneg %p59
        $region14: #{deep_feature_extractor.1} parent=11 // pred_check_branch
          %123 = sbr.rel (%p121) target = $region16
        $region15: #{deep_feature_extractor.1} parent=11 // pred_region
          _
        $region16: #{deep_feature_extractor.1} parent=11 // pred_fallthru
          _
        // Predicated region
        $region17: #{deep_feature_extractor.1} parent=11 // pred_check
          %p124 = pneg %p80
        $region18: #{deep_feature_extractor.1} parent=11 // pred_check_branch
          %126 = sbr.rel (%p124) target = $region20
        $region19: #{deep_feature_extractor.1} parent=11 // pred_region
          _
        $region20: #{deep_feature_extractor.1} parent=11 // pred_fallthru
          _
      $region12: #{deep_feature_extractor.1} parent=5 // pred_fallthru
        _
      %p127 = scmp.lt.s32.totalorder %s12, 2
      // Predicated region
      $region21: #{deep_feature_extractor.1} parent=5 // pred_check
        %p128 = pneg %p127
      $region22: #{deep_feature_extractor.1} parent=5 // pred_check_branch
        %130 = sbr.rel (%p128) target = $region24
      $region23: #{deep_feature_extractor.1} parent=5 // pred_region
        // Predicated region
        $region25: #{deep_feature_extractor.1} parent=23 // pred_check
          %p131 = pneg %p32
        $region26: #{deep_feature_extractor.1} parent=23 // pred_check_branch
          %133 = sbr.rel (%p131) target = $region28
        $region27: #{deep_feature_extractor.1} parent=23 // pred_region
          %p134 = scmp.lt.s32.totalorder %s12, 1
          %s135 = scalar_select %p134, %s12, 1
          %s136 = smul.addr %s135, 3
          %s137 = smul.addr %s136, 8
          %s138 = scalar_lea.vmem %s0, %s137
        $region28: #{deep_feature_extractor.1} parent=23 // pred_fallthru
          _
      $region24: #{deep_feature_extractor.1} parent=5 // pred_fallthru
        _
      %p139 = scmp.le.s32.totalorder 1, %s12
      %p140 = scmp.lt.s32.totalorder %s12, 3
      %p141 = pnand %p139, %p140
      %p142 = pneg %p141
      // Predicated region
      $region29: #{deep_feature_extractor.1} parent=5 // pred_check
        _
      $region30: #{deep_feature_extractor.1} parent=5 // pred_check_branch
        %144 = sbr.rel (%p141) target = $region32
      $region31: #{deep_feature_extractor.1} parent=5 // pred_region
        %s145 = ssub.s32 %s12, 1
        %p146 = scmp.lt.s32.totalorder %s17, 1
        %s147 = scalar_select %p146, %s17, 1
        %s148 = smul.addr %s147, 3
        %s149 = smul.addr %s148, 8
        %s150 = scalar_lea.vmem %s0, %s149
        %p151 = pneg %p38
        %p152 = pneg %p35
        %p153 = pneg %p59
        %p154 = pneg %p56
        %p155 = pneg %p80
        %p156 = pneg %p77
        %p157 = pneg %p106
        %p158 = pneg %p103
        %s159 = sand.u32 %s93, 1
        %s160 = scalar_lea.sflag [#allocation3], %s159
        %s161 = sand.u32 %s93, 1
        %s162 = scalar_lea.vmem [#allocation2], %s161
        %p163 = scmp.lt.s32.totalorder %s17, 1
        %s164 = scalar_select %p163, %s17, 1
        %s165 = smul.addr %s164, 3
        %s166 = smul.addr %s165, 8
        %s167 = scalar_lea.vmem %s0, %s166
        %v168 = vld [vmem:[%s167] sm:$0xff]
        %v169 = vld [vmem:[%s167 + $0x8] sm:$0xff]
        %v170 = vld [vmem:[%s167 + $0x10] sm:$0x3]
        %vm174 = vcmask 1046528
        %v175 = vrot.slane %v168, 1
        %v176 = vrot.slane %v169, 1
        %v177 = vsel %vm174, %v175, %v176
        %v178 = vrot.slane %v170, 1
        %v179 = vsel %vm174, %v176, %v178
        %180 = vrot.lane.b32.xlu0 %v177, 4
        %v181 = vpop.permute.xlu0 %180
        %182 = vrot.lane.b32.xlu0 %v179, 4
        %v183 = vpop.permute.xlu0 %182
        %vm186 = vcmask 1045504
        %v187 = vrot.slane %v168, 2
        %v188 = vrot.slane %v169, 2
        %v189 = vsel %vm186, %v187, %v188
        %v190 = vrot.slane %v170, 2
        %v191 = vsel %vm186, %v188, %v190
        %192 = vrot.lane.b32.xlu0 %v189, 8
        %v193 = vpop.permute.xlu0 %192
        %194 = vrot.lane.b32.xlu0 %v191, 8
        %v195 = vpop.permute.xlu0 %194
        %vm198 = vcmask 31744
        %v199 = vsel %vm198, %v168, %v181
        %v200 = vsel %vm198, %v169, %v183
        %vm201 = vcmask 64512
        %v202 = vsel %vm201, %v199, %v193
        %v203 = vsel %vm201, %v200, %v195
        %v204 = vld [vmem:[%s1] sm:$0xff]
        %v205 = vld [vmem:[%s1 + $0x8] sm:$0xf]
        %vm206 = vcmask 97280
        %v208 = vsel %vm206, %v202, 0
        %v211 = vsel %vm206, %v203, 0
        %vm213 = vcmask 1043456
        %v215 = vsel %vm213, %v205, 0
        %217 = vmatpush.msra.mxu0 0.0
        %218 = vmatpush.msra.mxu0 0.0
        %219 = vmatpush.msra.mxu0 0.0
        %220 = vmatpush.msra.mxu0 0.0
        %221 = vmatpush.msra.mxu0 0.0
        %222 = vmatpush.msra.mxu0 0.0
        %223 = vmatpush.msra.mxu0 0.0
        %224 = vmatpush.msra.mxu0 0.0
        %225 = vmatpush.msra.mxu0 0.0
        %226 = vmatpush.msra.mxu0 0.0
        %227 = vmatpush.msra.mxu0 0.0
        %228 = vmatpush.msra.mxu0 0.0
        %229 = vmatpush.msra.mxu0 0.0
        %230 = vmatpush.msra.mxu0 0.0
        %231 = vmatpush.msra.mxu0 %v215
        %232 = vmatpush.msra.mxu0 %v204
        %233 = vmatmul.f32.gmra.mxu0 %v208
        %v234 = vpop.f32.mrf.mxu0
        %v235 = vadd.f32 0.0, %v234
        %236 = vmatmul.f32.gmra.mxu0 %v211
        %v237 = vpop.f32.mrf.mxu0
        %v238 = vadd.f32 0.0, %v237
        %239 = vdwg.mxu0
        %v240 = vmax.f32 %v235, %v238
        %v241 = vrot.slane %v240, 4
        %v242 = vmax.f32 %v240, %v241
        %v243 = vrot.slane %v242, 2
        %v244 = vmax.f32 %v242, %v243
        %v245 = vrot.slane %v244, 1
        %v246 = vmax.f32 %v244, %v245
        %v247 = vld [vmem:[%s2] sm:$0x1]
        %v248 = vadd.f32 %v246, %v247
        %v249 = vmax.f32 %v248, 0.0
        %250 = vst [vmem:[%s162] sm:$0x1] %v249
        %s251 = sand.u32 %s93, 1
        %s252 = scalar_lea.sflag [#allocation3], %s251
        %s253 = sand.u32 %s93, 1
        %s254 = scalar_lea.vmem [#allocation2], %s253
        // Predicated region
        $region33: #{deep_feature_extractor.1} parent=31 // pred_check
          %p255 = pneg %p103
        $region34: #{deep_feature_extractor.1} parent=31 // pred_check_branch
          %257 = sbr.rel (%p255) target = $region36
        $region35: #{deep_feature_extractor.1} parent=31 // pred_region
          %259 = vsyncadd %s252, 0
          %s260 = scalar_lea.hbm %s3, %s17
          %s262 = sshll.u32 %s254, 4
          %s263 = int_to_ptr.vmem [resolvable:$true] %s262
          %s264 = sshll.u32 %s260, 4
          %s265 = int_to_ptr.hbm [resolvable:$true] %s264
          %267 = dma.vmem_to_hbm [thread:$0]  %s263, 16, %s265, %s252
        $region36: #{deep_feature_extractor.1} parent=31 // pred_fallthru
          _
      $region32: #{deep_feature_extractor.1} parent=5 // pred_fallthru
        _
      %p268 = scmp.le.s32.totalorder 2, %s12
      // Predicated region
      $region37: #{deep_feature_extractor.1} parent=5 // pred_check
        %p269 = pneg %p268
      $region38: #{deep_feature_extractor.1} parent=5 // pred_check_branch
        %271 = sbr.rel (%p269) target = $region40
      $region39: #{deep_feature_extractor.1} parent=5 // pred_region
        %s272 = ssub.s32 %s12, 2
        // Predicated region
        $region41: #{deep_feature_extractor.1} parent=39 // pred_check
          %p273 = pneg %p109
        $region42: #{deep_feature_extractor.1} parent=39 // pred_check_branch
          %275 = sbr.rel (%p273) target = $region44
        $region43: #{deep_feature_extractor.1} parent=39 // pred_region
          %s276 = sand.u32 %s94, 1
          %s277 = scalar_lea.sflag [#allocation3], %s276
          %s278 = sand.u32 %s94, 1
          %s279 = scalar_lea.vmem [#allocation2], %s278
          %281 = dma.done %s277, 16
        $region44: #{deep_feature_extractor.1} parent=39 // pred_fallthru
          _
      $region40: #{deep_feature_extractor.1} parent=5 // pred_fallthru
        _
    $region6: #{deep_feature_extractor.1} parent=1 // loop_footer
      %s16 = sadd.s32 1, %s12
    $region7: #{deep_feature_extractor.1} parent=1 // loop_footer_branch
      %11 = sbr.rel target = $region3
    $region8: #{deep_feature_extractor.1} parent=1 // loop_exit
      _
    %282 = vsyncpa [#allocation3], 1
    %s283 = scalar_lea.sflag [#allocation3], 1
    %284 = vsyncpa %s283, 1

</llo_original>
